<compile_context>
chip_gen: v6e
topology: v6e:2x2x1
jax: 0.10.0
libtpu: 0.0.40
codegen_flags: <defaults>
</compile_context>

<pallas_src>
import math

import jax
import jax.numpy as jnp
from jax import lax
from jax.experimental import pallas as pl
from jax.experimental.pallas import tpu as pltpu

SQRT_2 = math.sqrt(2)
TWO_PI = 2.0 * math.pi

_STRIP = 256  # rows per in-kernel strip (keeps `t` live range to ~32 vregs at H=128)


def _round_up(v, m):
    return -(-v // m) * m


def _fourier_kernel(x_ref, freqs_ref, out_ref):
    # x_ref:     (TM, 1)   f32 in VMEM
    # freqs_ref: (1, H)    f32 in VMEM (raw freqs; 2*pi folded in here)
    # out_ref:   (TM, 2H)  in VMEM
    h = freqs_ref.shape[1]
    tm = x_ref.shape[0]
    strip = min(tm, _STRIP)
    n_full = tm // strip
    rem = tm - n_full * strip

    # Same op order as the reference: (freqs * 2*pi) first, then the outer product,
    # so `t` is bit-identical to the jnp reference.
    f = freqs_ref[...] * TWO_PI                                     # (1, H)

    def emit(r0, rows):
        t = x_ref[pl.ds(r0, rows), :] * f                           # (rows, H) VPU outer product
        out_ref[pl.ds(r0, rows), pl.ds(0, h)] = (jnp.cos(t) * SQRT_2).astype(out_ref.dtype)
        out_ref[pl.ds(r0, rows), pl.ds(h, h)] = (jnp.sin(t) * SQRT_2).astype(out_ref.dtype)

    if n_full == 1 and rem == 0:
        emit(0, tm)
    else:
        def body(s, carry):
            emit(pl.multiple_of(s * strip, 8), strip)
            return carry

        lax.fori_loop(0, n_full, body, 0)
        if rem:
            emit(n_full * strip, rem)


def fourier_embedding(x, freqs, *, tile_rows=4096, out_dtype=jnp.float32):
    """x: (N,) float, freqs: (C/2,) float  ->  (N, C) `out_dtype` (default f32)."""
    n = x.shape[0]
    h = freqs.shape[0]
    c = 2 * h
    out_itemsize = jnp.dtype(out_dtype).itemsize

    # Row tile: multiple of 8; multiple of _STRIP when large; capped so one
    # output buffer is <= ~12 MiB (double-buffered total fits v7x's 64 MiB VMEM).
    out_row_bytes = _round_up(c, 128) * out_itemsize
    tm_cap = max(8, ((12 << 20) // out_row_bytes) // 8 * 8)
    tm = max(8, (min(tile_rows, tm_cap) // 8) * 8)
    if tm >= _STRIP:
        tm = (tm // _STRIP) * _STRIP
    tm = min(tm, _round_up(n, 8))

    # Ragged last block handled by Pallas: OOB input reads are padded, OOB
    # output writes are dropped -> no wrapper pad / slice copy of the output.
    grid = (pl.cdiv(n, tm),)

    x2 = x.astype(jnp.float32).reshape(n, 1)
    f2 = freqs.astype(jnp.float32).reshape(1, h)

    # VMEM budget: double-buffered x tile (lane-padded to 128), freqs, out tile.
    x_buf = tm * 128 * 4
    f_buf = 8 * _round_up(h, 128) * 4
    o_buf = tm * _round_up(c, 128) * out_itemsize
    vmem_bytes = int(min(max(2 * (x_buf + f_buf + o_buf) + (2 << 20), 16 << 20), 64 << 20))

    cost = pl.CostEstimate(
        flops=4 * n * h,
        transcendentals=2 * n * h,
        bytes_accessed=4 * (n + h) + n * c * out_itemsize,
    )

    return pl.pallas_call(
        _fourier_kernel,
        out_shape=jax.ShapeDtypeStruct((n, c), out_dtype),
        grid=grid,
        in_specs=[
            pl.BlockSpec((tm, 1), lambda i: (i, 0)),   # row tile of x
            pl.BlockSpec((1, h), lambda i: (0, 0)),    # freqs stay resident
        ],
        out_specs=pl.BlockSpec((tm, c), lambda i: (i, 0)),
        compiler_params=pltpu.CompilerParams(
            dimension_semantics=("parallel",),          # megacore split of the row grid
            vmem_limit_bytes=vmem_bytes,
        ),
        cost_estimate=cost,
    )(x2, f2)


def fourier_embedding_ref(x, freqs):
    """Pure-JAX reference matching the PyTorch forward."""
    t = jnp.outer(x.astype(jnp.float32), freqs.astype(jnp.float32) * TWO_PI)
    return jnp.concatenate([jnp.cos(t), jnp.sin(t)], axis=1) * SQRT_2


if __name__ == "__main__":
    key = jax.random.PRNGKey(0)
    k_freqs, k_x, k_x2 = jax.random.split(key, 3)

    num_channels = 256   # -> freqs has 128 entries (lane-aligned half)
    scale = 16.0

    # Deterministic "buffer" init mirroring torch.randn(C//2) * scale.
    freqs = jax.random.normal(k_freqs, (num_channels // 2,), dtype=jnp.float32) * scale

    # (1) Small batch, small tile -> multi-step grid with a ragged last block.
    x_small = jax.random.normal(k_x, (40,), dtype=jnp.float32)
    out = jax.block_until_ready(fourier_embedding(x_small, freqs, tile_rows=16))
    ref = fourier_embedding_ref(x_small, freqs)
    assert out.shape == (40, num_channels), out.shape
    # |t| reaches a few hundred with scale=16; f32 cos/sin range reduction in the
    # Mosaic vs XLA lowerings can differ by O(1e-4), hence the relaxed tolerance.
    assert jnp.allclose(out, ref, atol=1e-3, rtol=1e-3), float(jnp.max(jnp.abs(out - ref)))

    # (2) Default tile: single grid step, in-kernel strip loop + remainder strip.
    x_med = jax.random.normal(k_x2, (600,), dtype=jnp.float32)
    out2 = jax.block_until_ready(fourier_embedding(x_med, freqs))
    ref2 = fourier_embedding_ref(x_med, freqs)
    assert out2.shape == (600, num_channels), out2.shape
    assert jnp.allclose(out2, ref2, atol=1e-3, rtol=1e-3), float(jnp.max(jnp.abs(out2 - ref2)))

    # (3) Multi-step grid with larger tiles and a partial (OOB-dropped) final block.
    out3 = jax.block_until_ready(fourier_embedding(x_med, freqs, tile_rows=512))
    assert jnp.allclose(out3, ref2, atol=1e-3, rtol=1e-3), float(jnp.max(jnp.abs(out3 - ref2)))

    print("KERNEL_OK")
</pallas_src>

<mosaic_0001>
module attributes {stable_mosaic.version = 11 : i64} {
  func.func @_fourier_kernel(%arg0: i32, %arg1: memref<16x1xf32, #tpu.memory_space<vmem>>, %arg2: memref<1x128xf32, #tpu.memory_space<vmem>>, %arg3: memref<16x256xf32, #tpu.memory_space<vmem>>) attributes {dimension_semantics = [#tpu.dimension_semantics<parallel>], iteration_bounds = array<i64: 3>, scalar_prefetch = 0 : i64, scratch_operands = 0 : i64, tpu.core_type = #tpu.core_type<tc>, window_params = [{transform_indices = @transform_0, window_bounds = array<i64: 16, 1>}, {pipeline_mode = #tpu.pipeline_mode<synchronous>, transform_indices = @transform_1, window_bounds = array<i64: 1, 128>}, {transform_indices = @transform_2, window_bounds = array<i64: 16, 256>}]} {
    %c0 = arith.constant 0 : index
    %c0_0 = arith.constant 0 : index
    %0 = vector.load %arg2[%c0, %c0_0] : memref<1x128xf32, #tpu.memory_space<vmem>>, vector<1x128xf32>
    %cst = arith.constant 6.28318548 : f32
    %1 = vector.broadcast %cst : f32 to vector<1x128xf32>
    %2 = arith.mulf %0, %1 : vector<1x128xf32>
    %c0_1 = arith.constant 0 : index
    %c0_2 = arith.constant 0 : index
    %3 = vector.load %arg1[%c0_1, %c0_2] : memref<16x1xf32, #tpu.memory_space<vmem>>, vector<16x1xf32>
    %4 = vector.broadcast %3 : vector<16x1xf32> to vector<16x128xf32>
    %5 = vector.broadcast %2 : vector<1x128xf32> to vector<16x128xf32>
    %6 = arith.mulf %4, %5 : vector<16x128xf32>
    %7 = math.cos %6 : vector<16x128xf32>
    %cst_3 = arith.constant 1.41421354 : f32
    %8 = vector.broadcast %cst_3 : f32 to vector<16x128xf32>
    %9 = arith.mulf %7, %8 : vector<16x128xf32>
    %c0_4 = arith.constant 0 : index
    %c0_5 = arith.constant 0 : index
    %10 = vector.load %arg3[%c0_4, %c0_5] : memref<16x256xf32, #tpu.memory_space<vmem>>, vector<16x128xf32>
    tpu.vector_store %arg3[%c0_4, %c0_5], %9 {strides = array<i32>} : memref<16x256xf32, #tpu.memory_space<vmem>>, vector<16x128xf32>,
    %11 = math.sin %6 : vector<16x128xf32>
    %cst_6 = arith.constant 1.41421354 : f32
    %12 = vector.broadcast %cst_6 : f32 to vector<16x128xf32>
    %13 = arith.mulf %11, %12 : vector<16x128xf32>
    %c0_7 = arith.constant 0 : index
    %c128 = arith.constant 128 : index
    %14 = vector.load %arg3[%c0_7, %c128] : memref<16x256xf32, #tpu.memory_space<vmem>>, vector<16x128xf32>
    tpu.vector_store %arg3[%c0_7, %c128], %13 {strides = array<i32>} : memref<16x256xf32, #tpu.memory_space<vmem>>, vector<16x128xf32>,
    return
  }
  func.func @transform_0(%arg0: i32) -> (i32, i32) {
    %c0_i32 = arith.constant 0 : i32
    %c0_i32_0 = arith.constant 0 : i32
    return %arg0, %c0_i32 : i32, i32
  }
  func.func @transform_1(%arg0: i32) -> (i32, i32) {
    %c0_i32 = arith.constant 0 : i32
    %c0_i32_0 = arith.constant 0 : i32
    %c0_i32_1 = arith.constant 0 : i32
    return %c0_i32, %c0_i32_0 : i32, i32
  }
  func.func @transform_2(%arg0: i32) -> (i32, i32) {
    %c0_i32 = arith.constant 0 : i32
    %c0_i32_0 = arith.constant 0 : i32
    return %arg0, %c0_i32 : i32, i32
  }
}

</mosaic_0001>

<llo_original>
// kernel: tpu_custom_call.1
$region0: #{tpu_custom_call.1}
  #allocation0 [shape = 'u32[]', space=smem, size = 0x4, offset = 0x4, fixed_abs, tag = 'smem constant byte address 0x4 - core index']
  #allocation1 [shape = 'u32[144,128]{1,0:T(1,128)}', space=vmem, size = 0x12000, scoped, tag = 'internal scratch']
  %s0 = inlined_call_operand.vmem [shape: f32[40,1], index: 0, kind: input, shape index: {}]
  %s1 = inlined_call_operand.vmem [shape: f32[1,128], index: 1, kind: input, shape index: {}]
  %s2 = inlined_call_operand.hbm [shape: f32[40,256], index: 2, kind: output, shape index: {}]
  %s3 = sld [smem:[#allocation0]]
  $region41: #{tpu_custom_call.1} parent=0
    _
  %s5 = ssub.s32 1, %s3
  %s6 = scalar_select 0, %s5, %s3
  $region1: #{tpu_custom_call.1} parent=0
    #allocation2 [shape = 'u8[32768]{0}', space=vmem, size = 0x8000, scoped, tag = 'output window, operand 0']
    #allocation3 [shape = 's32[2]{0}', space=sflag, size = 0x8, scoped, tag = 'scoped memory for tpu_custom_call.1']
    %7 = vsyncpa [#allocation3], 0
    %s8 = scalar_lea.sflag [#allocation3], 1
    %9 = vsyncpa %s8, 0
    loop: start=0, step=1, limit=5
    $region2: #{tpu_custom_call.1} parent=1 // loop_pre_header
      _
    $region3: #{tpu_custom_call.1} parent=1 // loop_header
      %s11 = sphi 0, %s15
      %p12 = scmp.ge.s32.totalorder %s11, 5
      %s21 = sphi 0, %s23
      %s24 = sphi 0, %s21
      %s25 = sphi 0, %s24
      %s41 = sphi 0, %s25
      %s45 = sphi 0, %s45
      %s47 = sphi 0, %s45
      %s48 = sphi 0, %s47
      %s62 = sphi 0, %s48
      %s68 = sphi 0, %s70
      %s71 = sphi 0, %s68
      %s72 = sphi 0, %s71
      %s88 = sphi 0, %s72
    $region4: #{tpu_custom_call.1} parent=1 // loop_header_branch
      %14 = sbr.rel (%p12) target = $region8
    $region5: #{tpu_custom_call.1} parent=1 // loop_body
      %s16 = ssub.s32 %s11, 1
      %s17 = ssub.s32 %s11, 2
      %s18 = sadd.s32 %s11, 1
      %s19 = ssub.s32 %s11, %s18
      %p20 = scmp.eq.s32.totalorder %s19, 0
      %s22 = sadd.s32 %s21, 1
      %s23 = scalar_select %p20, %s21, %s22
      %p26 = pneg %p20
      %p27 = scmp.eq.s32.totalorder %s11, 2
      %p28 = por %p26, %p27
      %p29 = scmp.ne.s32.totalorder %s21, %s24
      %p30 = scmp.eq.s32.totalorder %s11, 0
      %p31 = por %p29, %p30
      %p32 = scmp.ne.s32.totalorder %s21, %s24
      %p33 = scmp.eq.s32.totalorder %s16, 2
      %p34 = por %p32, %p33
      %p35 = scmp.ne.s32.totalorder %s24, %s25
      %p36 = scmp.eq.s32.totalorder %s16, 0
      %p37 = por %p35, %p36
      %p38 = scmp.ne.s32.totalorder %s24, %s25
      %p39 = scmp.eq.s32.totalorder %s17, 2
      %p40 = por %p38, %p39
      %p42 = scmp.ne.s32.totalorder %s25, %s41
      %p43 = scmp.eq.s32.totalorder %s17, 0
      %p44 = por %p42, %p43
      %s46 = sadd.s32 %s45, 1
      %p49 = scmp.eq.s32.totalorder %s11, 2
      %p50 = scmp.ne.s32.totalorder %s45, %s47
      %p51 = scmp.eq.s32.totalorder %s11, 0
      %p52 = por %p50, %p51
      %p53 = scmp.ne.s32.totalorder %s45, %s47
      %p54 = scmp.eq.s32.totalorder %s16, 2
      %p55 = por %p53, %p54
      %p56 = scmp.ne.s32.totalorder %s47, %s48
      %p57 = scmp.eq.s32.totalorder %s16, 0
      %p58 = por %p56, %p57
      %p59 = scmp.ne.s32.totalorder %s47, %s48
      %p60 = scmp.eq.s32.totalorder %s17, 2
      %p61 = por %p59, %p60
      %p63 = scmp.ne.s32.totalorder %s48, %s62
      %p64 = scmp.eq.s32.totalorder %s17, 0
      %p65 = por %p63, %p64
      %s66 = ssub.s32 %s11, %s18
      %p67 = scmp.eq.s32.totalorder %s66, 0
      %s69 = sadd.s32 %s68, 1
      %s70 = scalar_select %p67, %s68, %s69
      %p73 = pneg %p67
      %p74 = scmp.eq.s32.totalorder %s11, 2
      %p75 = por %p73, %p74
      %p76 = scmp.ne.s32.totalorder %s68, %s71
      %p77 = scmp.eq.s32.totalorder %s11, 0
      %p78 = por %p76, %p77
      %p79 = scmp.ne.s32.totalorder %s68, %s71
      %p80 = scmp.eq.s32.totalorder %s16, 2
      %p81 = por %p79, %p80
      %p82 = scmp.ne.s32.totalorder %s71, %s72
      %p83 = scmp.eq.s32.totalorder %s16, 0
      %p84 = por %p82, %p83
      %p85 = scmp.ne.s32.totalorder %s71, %s72
      %p86 = scmp.eq.s32.totalorder %s17, 2
      %p87 = por %p85, %p86
      %p89 = scmp.ne.s32.totalorder %s72, %s88
      %p90 = scmp.eq.s32.totalorder %s17, 0
      %p91 = por %p89, %p90
      %p92 = scmp.le.s32.totalorder 1, %s11
      %p93 = scmp.lt.s32.totalorder %s11, 4
      %p94 = pnand %p92, %p93
      %p95 = pneg %p94
      // Predicated region
      $region9: #{tpu_custom_call.1} parent=5 // pred_check
        _
      $region10: #{tpu_custom_call.1} parent=5 // pred_check_branch
        %97 = sbr.rel (%p94) target = $region12
      $region11: #{tpu_custom_call.1} parent=5 // pred_region
        %s98 = ssub.s32 %s11, 1
        // Predicated region
        $region13: #{tpu_custom_call.1} parent=11 // pred_check
          %p99 = pneg %p58
        $region14: #{tpu_custom_call.1} parent=11 // pred_check_branch
          %101 = sbr.rel (%p99) target = $region16
        $region15: #{tpu_custom_call.1} parent=11 // pred_region
          _
        $region16: #{tpu_custom_call.1} parent=11 // pred_fallthru
          _
      $region12: #{tpu_custom_call.1} parent=5 // pred_fallthru
        _
      %p102 = scmp.lt.s32.totalorder %s11, 3
      // Predicated region
      $region17: #{tpu_custom_call.1} parent=5 // pred_check
        %p103 = pneg %p102
      $region18: #{tpu_custom_call.1} parent=5 // pred_check_branch
        %105 = sbr.rel (%p103) target = $region20
      $region19: #{tpu_custom_call.1} parent=5 // pred_region
        // Predicated region
        $region21: #{tpu_custom_call.1} parent=19 // pred_check
          %p106 = pneg %p31
        $region22: #{tpu_custom_call.1} parent=19 // pred_check_branch
          %108 = sbr.rel (%p106) target = $region24
        $region23: #{tpu_custom_call.1} parent=19 // pred_region
          %s109 = smul.u32 2, %s11
          %s110 = ssub.s32 5, %s109
          %p111 = scmp.lt.s32.totalorder %s110, 2
          %s112 = scalar_select %p111, %s110, 2
          %s113 = smul.u32 128, %s112
          %p114 = scmp.lt.s32.totalorder %s109, 4
          %s115 = scalar_select %p114, %s109, 4
          %s116 = smul.addr %s115, 8
          %s117 = scalar_lea.vmem %s0, %s116
          %s118 = smul.u32 2, %s11
          %s119 = ssub.s32 5, %s118
          %p120 = scmp.lt.s32.totalorder %s119, 2
          %s121 = scalar_select %p120, %s119, 2
          %s122 = smul.u32 128, %s121
        $region24: #{tpu_custom_call.1} parent=19 // pred_fallthru
          _
      $region20: #{tpu_custom_call.1} parent=5 // pred_fallthru
        _
      %p123 = scmp.le.s32.totalorder 1, %s11
      %p124 = scmp.lt.s32.totalorder %s11, 4
      %p125 = pnand %p123, %p124
      %p126 = pneg %p125
      // Predicated region
      $region25: #{tpu_custom_call.1} parent=5 // pred_check
        _
      $region26: #{tpu_custom_call.1} parent=5 // pred_check_branch
        %128 = sbr.rel (%p125) target = $region28
      $region27: #{tpu_custom_call.1} parent=5 // pred_region
        %s129 = ssub.s32 %s11, 1
        %s130 = smul.u32 2, %s16
        %s131 = ssub.s32 5, %s130
        %p132 = scmp.lt.s32.totalorder %s131, 2
        %s133 = scalar_select %p132, %s131, 2
        %s134 = smul.u32 128, %s133
        %p135 = scmp.lt.s32.totalorder %s130, 4
        %s136 = scalar_select %p135, %s130, 4
        %s137 = smul.addr %s136, 8
        %s138 = scalar_lea.vmem %s0, %s137
        %p139 = pneg %p37
        %p140 = pneg %p34
        %p141 = pneg %p58
        %p142 = pneg %p55
        %p143 = pneg %p84
        %p144 = pneg %p81
        %s145 = sand.u32 %s71, 1
        %s146 = scalar_lea.sflag [#allocation3], %s145
        %s147 = sand.u32 %s71, 1
        %s148 = smul.addr %s147, 32
        %s149 = scalar_lea.vmem [#allocation2], %s148
        %s150 = smul.u32 2, %s16
        %s151 = ssub.s32 5, %s150
        %p152 = scmp.lt.s32.totalorder %s151, 2
        %s153 = scalar_select %p152, %s151, 2
        %s154 = smul.u32 128, %s153
        %p155 = scmp.lt.s32.totalorder %s150, 4
        %s156 = scalar_select %p155, %s150, 4
        %s157 = smul.addr %s156, 8
        %s158 = scalar_lea.vmem %s0, %s157
        %s159 = smul.u32 2, %s16
        %s160 = ssub.s32 5, %s159
        %p161 = scmp.lt.s32.totalorder %s160, 2
        %s162 = scalar_select %p161, %s160, 2
        %s163 = smul.u32 128, %s162
        %s164 = smul.u32 2, %s16
        %s165 = ssub.s32 5, %s164
        %p166 = scmp.lt.s32.totalorder %s165, 2
        %s167 = scalar_select %p166, %s165, 2
        %s168 = smul.u32 128, %s167
        %s169 = smul.u32 %s168, 2
        %v170 = vld [vmem:[%s1] sm:$0x1]
        %v171 = vmul.f32 %v170, 6.2831855
        %v172 = vld [vmem:[%s158] sm:$0xff]
        %v173 = vld [vmem:[%s158 + $0x8] sm:$0xff]
        %175 = vset.pattern.permute.xlu0 0
        %176 = vperm.xlu0 %175, %v172
        %v177 = vpop.permute.xlu0 %176
        %180 = vset.pattern.permute.xlu0 0
        %181 = vperm.xlu0 %180, %v173
        %v182 = vpop.permute.xlu0 %181
        %v185 = vlaneseq
        %v186 = vshrl.u32 %v185, 7
        %v187 = vsub.s32 0, %v186
        %v188 = vrot.slane %v171, %v187
        %v190 = vmul.f32 %v177, %v188
        %v191 = vmul.f32 %v182, %v188
        %v192 = vand.u32 2147483647, %v190
        %vm193 = vcmp.le.f32.partialorder %v192, 0.7853982
        %vm194 = vcmp.lt.s32.totalorder %v190, 0
        %v195 = vand.u32 %v190, 2139095040
        %v196 = vshrl.u32 %v195, 23
        %v197 = vsub.s32 %v196, 127
        %v198 = vand.u32 2147483647, %v190
        %v199 = vand.u32 %v198, 8388607
        %v200 = vor.u32 %v199, 8388608
        %v201 = vsub.s32 0, %v200
        %v202 = vadd.s32 %v197, 1
        %vm203 = vcmp.gt.s32.totalorder %v202, 0
        %v204 = vsel %vm203, %v202, 0
        %v205 = vshrl.u32 %v204, 5
        %v206 = vand.u32 %v204, 31
        %v207 = vsub.s32 32, %v206
        %v208 = vshrl.u32 683565275, %v207
        %v209 = vshll.u32 683565275, %v206
        %v210 = vshrl.u32 2475754826, %v207
        %v211 = vor.u32 %v209, %v210
        %v212 = vshll.u32 2475754826, %v206
        %v213 = vshrl.u32 2131351028, %v207
        %v214 = vor.u32 %v212, %v213
        %v215 = vshll.u32 2131351028, %v206
        %v216 = vshrl.u32 2102212464, %v207
        %v217 = vor.u32 %v215, %v216
        %v218 = vshll.u32 2102212464, %v206
        %v219 = vshrl.u32 920167782, %v207
        %v220 = vor.u32 %v218, %v219
        %v221 = vshll.u32 920167782, %v206
        %v222 = vshrl.u32 1326507024, %v207
        %v223 = vor.u32 %v221, %v222
        %vm224 = vcmp.lt.s32.totalorder %v205, 1
        %vm225 = vcmp.lt.s32.totalorder %v205, 2
        %vm226 = vcmp.lt.s32.totalorder %v205, 3
        %vm227 = vcmp.lt.s32.totalorder %v205, 4
        %v228 = vsel %vm224, %v208, %v211
        %v229 = vsel %vm227, %v217, 2102212464
        %v230 = vsel %vm226, %v214, %v229
        %v231 = vsel %vm225, %v228, %v230
        %v232 = vsel %vm224, %v211, %v214
        %v233 = vsel %vm227, %v220, 920167782
        %v234 = vsel %vm226, %v217, %v233
        %v235 = vsel %vm225, %v232, %v234
        %v236 = vsel %vm224, %v214, %v217
        %v237 = vsel %vm227, %v223, 1326507024
        %v238 = vsel %vm226, %v220, %v237
        %v239 = vsel %vm225, %v236, %v238
        %v240 = vshll.u32 %v200, 8
        %v241 = vmul.u32.u64.compose %v240, %v239
        %v242 = vextract.low.u32 %v241
        %v243 = vextract.high.u32 %v241
        %v244 = vmul.u32.u64.compose %v240, %v235
        %v245 = vextract.low.u32 %v244
        %v246 = vextract.high.u32 %v244
        %v247 = vmul.u32 %v240, %v231
        %v248 = vadd.s32 %v243, %v245
        %vm249 = vc.u32 %v243, %v245
        %v250 = vadd.s32 %v246, 1
        %v251 = vsel %vm249, %v250, %v246
        %v252 = vadd.s32 %v247, %v251
        %v253 = vadd.s32 %v252, 536870912
        %v254 = vshrl.u32 %v253, 30
        %v255 = vshll.u32 %v254, 30
        %v256 = vsub.s32 %v252, %v255
        %vm257 = vcmp.lt.s32.totalorder %v256, 0
        %v258 = vsub.s32 0, %v256
        %v259 = vsel %vm257, %v258, %v256
        %v260 = vclz %v259
        %v261 = vsub.s32 %v260, 2
        %vm262 = vcmp.gt.s32.totalorder 0, %v261
        %v263 = vsel %vm262, 0, %v261
        %v264 = vsub.s32 32, %v263
        %v265 = vshll.u32 %v256, %v263
        %v266 = vshrl.u32 %v248, %v264
        %v267 = vor.u32 %v265, %v266
        %v268 = vsub.s32 4294967266, %v263
        %v269 = vadd.s32 %v268, 127
        %v270 = vshll.u32 %v269, 23
        %v271 = vor.u32 4788187, %v270
        %v272 = vand.u32 2147483647, %v271
        %v274 = vcvt.s32.f32 %v267
        %v275 = vmul.f32 %v274, %v272
        %v276 = vxor.u32 %v275, 2147483648
        %v277 = vsel %vm194, %v276, %v275
        %v278 = vsub.s32 4, %v254
        %v279 = vsel %vm194, %v278, %v254
        %v280 = vsel %vm193, %v190, %v277
        %v281 = vsel %vm193, 0, %v279
        %v282 = vcosq.f32.pop %v280
        %v283 = vsinq.f32.pop %v280
        %vm284 = vweird.f32 %v190
        %v285 = vand.u32 %v281, 3
        %vm286 = vcmp.lt.s32.totalorder %v285, 2
        %vm287 = vcmp.eq.s32.totalorder %v285, 0
        %v288 = vxor.u32 %v283, 2147483648
        %v289 = vsel %vm287, %v282, %v288
        %vm290 = vcmp.eq.s32.totalorder %v285, 2
        %v291 = vxor.u32 %v282, 2147483648
        %v292 = vsel %vm290, %v291, %v283
        %v293 = vsel %vm286, %v289, %v292
        %v294 = vsel %vm284, nan, %v293
        %v295 = vand.u32 2147483647, %v191
        %vm296 = vcmp.le.f32.partialorder %v295, 0.7853982
        %vm297 = vcmp.lt.s32.totalorder %v191, 0
        %v298 = vand.u32 %v191, 2139095040
        %v299 = vshrl.u32 %v298, 23
        %v300 = vsub.s32 %v299, 127
        %v301 = vand.u32 2147483647, %v191
        %v302 = vand.u32 %v301, 8388607
        %v303 = vor.u32 %v302, 8388608
        %v304 = vsub.s32 0, %v303
        %v305 = vadd.s32 %v300, 1
        %vm306 = vcmp.gt.s32.totalorder %v305, 0
        %v307 = vsel %vm306, %v305, 0
        %v308 = vshrl.u32 %v307, 5
        %v309 = vand.u32 %v307, 31
        %v310 = vsub.s32 32, %v309
        %v311 = vshrl.u32 683565275, %v310
        %v312 = vshll.u32 683565275, %v309
        %v313 = vshrl.u32 2475754826, %v310
        %v314 = vor.u32 %v312, %v313
        %v315 = vshll.u32 2475754826, %v309
        %v316 = vshrl.u32 2131351028, %v310
        %v317 = vor.u32 %v315, %v316
        %v318 = vshll.u32 2131351028, %v309
        %v319 = vshrl.u32 2102212464, %v310
        %v320 = vor.u32 %v318, %v319
        %v321 = vshll.u32 2102212464, %v309
        %v322 = vshrl.u32 920167782, %v310
        %v323 = vor.u32 %v321, %v322
        %v324 = vshll.u32 920167782, %v309
        %v325 = vshrl.u32 1326507024, %v310
        %v326 = vor.u32 %v324, %v325
        %vm327 = vcmp.lt.s32.totalorder %v308, 1
        %vm328 = vcmp.lt.s32.totalorder %v308, 2
        %vm329 = vcmp.lt.s32.totalorder %v308, 3
        %vm330 = vcmp.lt.s32.totalorder %v308, 4
        %v331 = vsel %vm327, %v311, %v314
        %v332 = vsel %vm330, %v320, 2102212464
        %v333 = vsel %vm329, %v317, %v332
        %v334 = vsel %vm328, %v331, %v333
        %v335 = vsel %vm327, %v314, %v317
        %v336 = vsel %vm330, %v323, 920167782
        %v337 = vsel %vm329, %v320, %v336
        %v338 = vsel %vm328, %v335, %v337
        %v339 = vsel %vm327, %v317, %v320
        %v340 = vsel %vm330, %v326, 1326507024
        %v341 = vsel %vm329, %v323, %v340
        %v342 = vsel %vm328, %v339, %v341
        %v343 = vshll.u32 %v303, 8
        %v344 = vmul.u32.u64.compose %v343, %v342
        %v345 = vextract.low.u32 %v344
        %v346 = vextract.high.u32 %v344
        %v347 = vmul.u32.u64.compose %v343, %v338
        %v348 = vextract.low.u32 %v347
        %v349 = vextract.high.u32 %v347
        %v350 = vmul.u32 %v343, %v334
        %v351 = vadd.s32 %v346, %v348
        %vm352 = vc.u32 %v346, %v348
        %v353 = vadd.s32 %v349, 1
        %v354 = vsel %vm352, %v353, %v349
        %v355 = vadd.s32 %v350, %v354
        %v356 = vadd.s32 %v355, 536870912
        %v357 = vshrl.u32 %v356, 30
        %v358 = vshll.u32 %v357, 30
        %v359 = vsub.s32 %v355, %v358
        %vm360 = vcmp.lt.s32.totalorder %v359, 0
        %v361 = vsub.s32 0, %v359
        %v362 = vsel %vm360, %v361, %v359
        %v363 = vclz %v362
        %v364 = vsub.s32 %v363, 2
        %vm365 = vcmp.gt.s32.totalorder 0, %v364
        %v366 = vsel %vm365, 0, %v364
        %v367 = vsub.s32 32, %v366
        %v368 = vshll.u32 %v359, %v366
        %v369 = vshrl.u32 %v351, %v367
        %v370 = vor.u32 %v368, %v369
        %v371 = vsub.s32 4294967266, %v366
        %v372 = vadd.s32 %v371, 127
        %v373 = vshll.u32 %v372, 23
        %v374 = vor.u32 4788187, %v373
        %v375 = vand.u32 2147483647, %v374
        %v377 = vcvt.s32.f32 %v370
        %v378 = vmul.f32 %v377, %v375
        %v379 = vxor.u32 %v378, 2147483648
        %v380 = vsel %vm297, %v379, %v378
        %v381 = vsub.s32 4, %v357
        %v382 = vsel %vm297, %v381, %v357
        %v383 = vsel %vm296, %v191, %v380
        %v384 = vsel %vm296, 0, %v382
        %v385 = vcosq.f32.pop %v383
        %v386 = vsinq.f32.pop %v383
        %vm387 = vweird.f32 %v191
        %v388 = vand.u32 %v384, 3
        %vm389 = vcmp.lt.s32.totalorder %v388, 2
        %vm390 = vcmp.eq.s32.totalorder %v388, 0
        %v391 = vxor.u32 %v386, 2147483648
        %v392 = vsel %vm390, %v385, %v391
        %vm393 = vcmp.eq.s32.totalorder %v388, 2
        %v394 = vxor.u32 %v385, 2147483648
        %v395 = vsel %vm393, %v394, %v386
        %v396 = vsel %vm389, %v392, %v395
        %v397 = vsel %vm387, nan, %v396
        %v398 = vmul.f32 %v294, 1.4142135
        %v399 = vmul.f32 %v397, 1.4142135
        %400 = vst [vmem:[%s149] sm:$0xff] %v398
        %401 = vst [vmem:[%s149 + $0x10] sm:$0xff] %v399
        %v402 = vand.u32 2147483647, %v190
        %vm403 = vcmp.le.f32.partialorder %v402, 0.7853982
        %vm404 = vcmp.lt.s32.totalorder %v190, 0
        %v405 = vand.u32 %v190, 2139095040
        %v406 = vshrl.u32 %v405, 23
        %v407 = vsub.s32 %v406, 127
        %v408 = vand.u32 2147483647, %v190
        %v409 = vand.u32 %v408, 8388607
        %v410 = vor.u32 %v409, 8388608
        %v411 = vsub.s32 0, %v410
        %v412 = vadd.s32 %v407, 1
        %vm413 = vcmp.gt.s32.totalorder %v412, 0
        %v414 = vsel %vm413, %v412, 0
        %v415 = vshrl.u32 %v414, 5
        %v416 = vand.u32 %v414, 31
        %v417 = vsub.s32 32, %v416
        %v418 = vshrl.u32 683565275, %v417
        %v419 = vshll.u32 683565275, %v416
        %v420 = vshrl.u32 2475754826, %v417
        %v421 = vor.u32 %v419, %v420
        %v422 = vshll.u32 2475754826, %v416
        %v423 = vshrl.u32 2131351028, %v417
        %v424 = vor.u32 %v422, %v423
        %v425 = vshll.u32 2131351028, %v416
        %v426 = vshrl.u32 2102212464, %v417
        %v427 = vor.u32 %v425, %v426
        %v428 = vshll.u32 2102212464, %v416
        %v429 = vshrl.u32 920167782, %v417
        %v430 = vor.u32 %v428, %v429
        %v431 = vshll.u32 920167782, %v416
        %v432 = vshrl.u32 1326507024, %v417
        %v433 = vor.u32 %v431, %v432
        %vm434 = vcmp.lt.s32.totalorder %v415, 1
        %vm435 = vcmp.lt.s32.totalorder %v415, 2
        %vm436 = vcmp.lt.s32.totalorder %v415, 3
        %vm437 = vcmp.lt.s32.totalorder %v415, 4
        %v438 = vsel %vm434, %v418, %v421
        %v439 = vsel %vm437, %v427, 2102212464
        %v440 = vsel %vm436, %v424, %v439
        %v441 = vsel %vm435, %v438, %v440
        %v442 = vsel %vm434, %v421, %v424
        %v443 = vsel %vm437, %v430, 920167782
        %v444 = vsel %vm436, %v427, %v443
        %v445 = vsel %vm435, %v442, %v444
        %v446 = vsel %vm434, %v424, %v427
        %v447 = vsel %vm437, %v433, 1326507024
        %v448 = vsel %vm436, %v430, %v447
        %v449 = vsel %vm435, %v446, %v448
        %v450 = vshll.u32 %v410, 8
        %v451 = vmul.u32.u64.compose %v450, %v449
        %v452 = vextract.low.u32 %v451
        %v453 = vextract.high.u32 %v451
        %v454 = vmul.u32.u64.compose %v450, %v445
        %v455 = vextract.low.u32 %v454
        %v456 = vextract.high.u32 %v454
        %v457 = vmul.u32 %v450, %v441
        %v458 = vadd.s32 %v453, %v455
        %vm459 = vc.u32 %v453, %v455
        %v460 = vadd.s32 %v456, 1
        %v461 = vsel %vm459, %v460, %v456
        %v462 = vadd.s32 %v457, %v461
        %v463 = vadd.s32 %v462, 536870912
        %v464 = vshrl.u32 %v463, 30
        %v465 = vshll.u32 %v464, 30
        %v466 = vsub.s32 %v462, %v465
        %vm467 = vcmp.lt.s32.totalorder %v466, 0
        %v468 = vsub.s32 0, %v466
        %v469 = vsel %vm467, %v468, %v466
        %v470 = vclz %v469
        %v471 = vsub.s32 %v470, 2
        %vm472 = vcmp.gt.s32.totalorder 0, %v471
        %v473 = vsel %vm472, 0, %v471
        %v474 = vsub.s32 32, %v473
        %v475 = vshll.u32 %v466, %v473
        %v476 = vshrl.u32 %v458, %v474
        %v477 = vor.u32 %v475, %v476
        %v478 = vsub.s32 4294967266, %v473
        %v479 = vadd.s32 %v478, 127
        %v480 = vshll.u32 %v479, 23
        %v481 = vor.u32 4788187, %v480
        %v482 = vand.u32 2147483647, %v481
        %v484 = vcvt.s32.f32 %v477
        %v485 = vmul.f32 %v484, %v482
        %v486 = vxor.u32 %v485, 2147483648
        %v487 = vsel %vm404, %v486, %v485
        %v488 = vsub.s32 4, %v464
        %v489 = vsel %vm404, %v488, %v464
        %v490 = vsel %vm403, %v190, %v487
        %v491 = vsel %vm403, 0, %v489
        %v492 = vcosq.f32.pop %v490
        %v493 = vsinq.f32.pop %v490
        %vm494 = vweird.f32 %v190
        %v495 = vadd.s32 %v491, 3
        %v496 = vand.u32 %v495, 3
        %vm497 = vcmp.lt.s32.totalorder %v496, 2
        %vm498 = vcmp.eq.s32.totalorder %v496, 0
        %v499 = vxor.u32 %v493, 2147483648
        %v500 = vsel %vm498, %v492, %v499
        %vm501 = vcmp.eq.s32.totalorder %v496, 2
        %v502 = vxor.u32 %v492, 2147483648
        %v503 = vsel %vm501, %v502, %v493
        %v504 = vsel %vm497, %v500, %v503
        %v505 = vsel %vm494, nan, %v504
        %v506 = vand.u32 2147483647, %v191
        %vm507 = vcmp.le.f32.partialorder %v506, 0.7853982
        %vm508 = vcmp.lt.s32.totalorder %v191, 0
        %v509 = vand.u32 %v191, 2139095040
        %v510 = vshrl.u32 %v509, 23
        %v511 = vsub.s32 %v510, 127
        %v512 = vand.u32 2147483647, %v191
        %v513 = vand.u32 %v512, 8388607
        %v514 = vor.u32 %v513, 8388608
        %v515 = vsub.s32 0, %v514
        %v516 = vadd.s32 %v511, 1
        %vm517 = vcmp.gt.s32.totalorder %v516, 0
        %v518 = vsel %vm517, %v516, 0
        %v519 = vshrl.u32 %v518, 5
        %v520 = vand.u32 %v518, 31
        %v521 = vsub.s32 32, %v520
        %v522 = vshrl.u32 683565275, %v521
        %v523 = vshll.u32 683565275, %v520
        %v524 = vshrl.u32 2475754826, %v521
        %v525 = vor.u32 %v523, %v524
        %v526 = vshll.u32 2475754826, %v520
        %v527 = vshrl.u32 2131351028, %v521
        %v528 = vor.u32 %v526, %v527
        %v529 = vshll.u32 2131351028, %v520
        %v530 = vshrl.u32 2102212464, %v521
        %v531 = vor.u32 %v529, %v530
        %v532 = vshll.u32 2102212464, %v520
        %v533 = vshrl.u32 920167782, %v521
        %v534 = vor.u32 %v532, %v533
        %v535 = vshll.u32 920167782, %v520
        %v536 = vshrl.u32 1326507024, %v521
        %v537 = vor.u32 %v535, %v536
        %vm538 = vcmp.lt.s32.totalorder %v519, 1
        %vm539 = vcmp.lt.s32.totalorder %v519, 2
        %vm540 = vcmp.lt.s32.totalorder %v519, 3
        %vm541 = vcmp.lt.s32.totalorder %v519, 4
        %v542 = vsel %vm538, %v522, %v525
        %v543 = vsel %vm541, %v531, 2102212464
        %v544 = vsel %vm540, %v528, %v543
        %v545 = vsel %vm539, %v542, %v544
        %v546 = vsel %vm538, %v525, %v528
        %v547 = vsel %vm541, %v534, 920167782
        %v548 = vsel %vm540, %v531, %v547
        %v549 = vsel %vm539, %v546, %v548
        %v550 = vsel %vm538, %v528, %v531
        %v551 = vsel %vm541, %v537, 1326507024
        %v552 = vsel %vm540, %v534, %v551
        %v553 = vsel %vm539, %v550, %v552
        %v554 = vshll.u32 %v514, 8
        %v555 = vmul.u32.u64.compose %v554, %v553
        %v556 = vextract.low.u32 %v555
        %v557 = vextract.high.u32 %v555
        %v558 = vmul.u32.u64.compose %v554, %v549
        %v559 = vextract.low.u32 %v558
        %v560 = vextract.high.u32 %v558
        %v561 = vmul.u32 %v554, %v545
        %v562 = vadd.s32 %v557, %v559
        %vm563 = vc.u32 %v557, %v559
        %v564 = vadd.s32 %v560, 1
        %v565 = vsel %vm563, %v564, %v560
        %v566 = vadd.s32 %v561, %v565
        %v567 = vadd.s32 %v566, 536870912
        %v568 = vshrl.u32 %v567, 30
        %v569 = vshll.u32 %v568, 30
        %v570 = vsub.s32 %v566, %v569
        %vm571 = vcmp.lt.s32.totalorder %v570, 0
        %v572 = vsub.s32 0, %v570
        %v573 = vsel %vm571, %v572, %v570
        %v574 = vclz %v573
        %v575 = vsub.s32 %v574, 2
        %vm576 = vcmp.gt.s32.totalorder 0, %v575
        %v577 = vsel %vm576, 0, %v575
        %v578 = vsub.s32 32, %v577
        %v579 = vshll.u32 %v570, %v577
        %v580 = vshrl.u32 %v562, %v578
        %v581 = vor.u32 %v579, %v580
        %v582 = vsub.s32 4294967266, %v577
        %v583 = vadd.s32 %v582, 127
        %v584 = vshll.u32 %v583, 23
        %v585 = vor.u32 4788187, %v584
        %v586 = vand.u32 2147483647, %v585
        %v588 = vcvt.s32.f32 %v581
        %v589 = vmul.f32 %v588, %v586
        %v590 = vxor.u32 %v589, 2147483648
        %v591 = vsel %vm508, %v590, %v589
        %v592 = vsub.s32 4, %v568
        %v593 = vsel %vm508, %v592, %v568
        %v594 = vsel %vm507, %v191, %v591
        %v595 = vsel %vm507, 0, %v593
        %v596 = vcosq.f32.pop %v594
        %v597 = vsinq.f32.pop %v594
        %vm598 = vweird.f32 %v191
        %v599 = vadd.s32 %v595, 3
        %v600 = vand.u32 %v599, 3
        %vm601 = vcmp.lt.s32.totalorder %v600, 2
        %vm602 = vcmp.eq.s32.totalorder %v600, 0
        %v603 = vxor.u32 %v597, 2147483648
        %v604 = vsel %vm602, %v596, %v603
        %vm605 = vcmp.eq.s32.totalorder %v600, 2
        %v606 = vxor.u32 %v596, 2147483648
        %v607 = vsel %vm605, %v606, %v597
        %v608 = vsel %vm601, %v604, %v607
        %v609 = vsel %vm598, nan, %v608
        %v610 = vmul.f32 %v505, 1.4142135
        %v611 = vmul.f32 %v609, 1.4142135
        %612 = vst [vmem:[%s149 + $0x8] sm:$0xff] %v610
        %613 = vst [vmem:[%s149 + $0x18] sm:$0xff] %v611
        %s614 = sand.u32 %s71, 1
        %s615 = scalar_lea.sflag [#allocation3], %s614
        %s616 = sand.u32 %s71, 1
        %s617 = smul.addr %s616, 32
        %s618 = scalar_lea.vmem [#allocation2], %s617
        // Predicated region
        $region29: #{tpu_custom_call.1} parent=27 // pred_check
          %p619 = pneg %p81
        $region30: #{tpu_custom_call.1} parent=27 // pred_check_branch
          %621 = sbr.rel (%p619) target = $region32
        $region31: #{tpu_custom_call.1} parent=27 // pred_region
          %s622 = smul.u32 2, %s16
          %s623 = ssub.s32 5, %s622
          %p624 = scmp.lt.s32.totalorder %s623, 2
          %s625 = scalar_select %p624, %s623, 2
          %s626 = smul.u32 128, %s625
          %s627 = smul.u32 %s626, 2
          %s629 = ssub.s32 512, %s627
          %630 = vsyncadd %s615, %s629
          %p631 = scmp.ne.s32.totalorder 0, %s627
          %s632 = smul.addr %s622, 2
          %s633 = smul.addr %s632, 128
          %s634 = scalar_lea.hbm %s2, %s633
          %s635 = smul.u32 16, %s625
          %s636 = sshll.u32 %s618, 4
          %s637 = int_to_ptr.vmem [resolvable:$true] %s636
          %s638 = sshll.u32 %s635, 4
          %642 = dma.vmem_to_hbm [thread:$0]  (%p631), %s637, %s638, %s634, %s615, 256, 256, 16
        $region32: #{tpu_custom_call.1} parent=27 // pred_fallthru
          _
      $region28: #{tpu_custom_call.1} parent=5 // pred_fallthru
        _
      %p643 = scmp.le.s32.totalorder 2, %s11
      // Predicated region
      $region33: #{tpu_custom_call.1} parent=5 // pred_check
        %p644 = pneg %p643
      $region34: #{tpu_custom_call.1} parent=5 // pred_check_branch
        %646 = sbr.rel (%p644) target = $region36
      $region35: #{tpu_custom_call.1} parent=5 // pred_region
        %s647 = ssub.s32 %s11, 2
        // Predicated region
        $region37: #{tpu_custom_call.1} parent=35 // pred_check
          %p648 = pneg %p87
        $region38: #{tpu_custom_call.1} parent=35 // pred_check_branch
          %650 = sbr.rel (%p648) target = $region40
        $region39: #{tpu_custom_call.1} parent=35 // pred_region
          %s651 = sand.u32 %s72, 1
          %s652 = scalar_lea.sflag [#allocation3], %s651
          %s653 = sand.u32 %s72, 1
          %s654 = smul.addr %s653, 32
          %s655 = scalar_lea.vmem [#allocation2], %s654
          %656 = dma.done %s652, 512
        $region40: #{tpu_custom_call.1} parent=35 // pred_fallthru
          _
      $region36: #{tpu_custom_call.1} parent=5 // pred_fallthru
        _
    $region6: #{tpu_custom_call.1} parent=1 // loop_footer
      %s15 = sadd.s32 1, %s11
    $region7: #{tpu_custom_call.1} parent=1 // loop_footer_branch
      %10 = sbr.rel target = $region3
    $region8: #{tpu_custom_call.1} parent=1 // loop_exit
      _
    %657 = vsyncpa [#allocation3], 1
    %s658 = scalar_lea.sflag [#allocation3], 1
    %659 = vsyncpa %s658, 1

</llo_original>
